<compile_context>
chip_gen: v5e
topology: v5e:2x2
jax: 0.10.0
libtpu: 0.0.40
codegen_flags: <defaults>
</compile_context>

<pallas_src>
import jax
import jax.numpy as jnp
from jax.experimental import pallas as pl
from jax.experimental.pallas import tpu as pltpu


def _round_up(x, m):
    return ((x + m - 1) // m) * m


def _cdiv(a, b):
    return -(-a // b)


# ----------------------------- Pallas kernel --------------------------------

def _conv1x1_kernel(x_ref, w_ref, b_ref, o_ref):
    """One (batch-tile, spatial-tile) block of a 1x1 conv.

    x_ref: (BT, C_in, TS)   input slab, flattened spatial on the lane axis
    w_ref: (C_out, C_in)    conv weight (1x1 kernel squeezed out)
    b_ref: (C_out, 1)       bias (float32)
    o_ref: (BT, C_out, TS)  output slab (lane-dense store)
    """
    w = w_ref[...]
    b = b_ref[...]
    bt = x_ref.shape[0]
    for i in range(bt):  # static batch tile, fully unrolled
        y = jnp.dot(w, x_ref[i], preferred_element_type=jnp.float32)
        o_ref[i] = (y + b).astype(o_ref.dtype)


# ------------------------------- Tiling --------------------------------------

def _pick_tiles(B, S, C_in, C_out, in_itemsize, out_itemsize, target_block_bytes):
    """Choose (BT, TS): batch tile and lane-dense spatial tile."""
    bytes_per_col = C_in * in_itemsize + C_out * out_itemsize
    cols_budget = max(128, target_block_bytes // bytes_per_col)

    if S <= cols_budget:
        # Whole spatial axis in one block; amortize per-step overhead by also
        # blocking over batch.
        TS = S
        BT = max(1, min(B, cols_budget // max(S, 1)))
        while B % BT:            # make BT an exact divisor of B
            BT -= 1
    else:
        TS = max(128, min((cols_budget // 128) * 128, 32768))
        # Prefer a tile that divides S exactly (no partial trailing block) as
        # long as it does not shrink the tile by more than 2x; otherwise keep
        # TS and let Pallas mask the partial last block (no padding copies).
        best = None
        for cand in range(TS, 127, -128):
            if S % cand == 0:
                best = cand
                break
        if best is not None and 2 * best >= TS:
            TS = best
        BT = 1

    # Keep at least 2 grid steps so both v7x TensorCores get work
    # (no-op concern on single-core v5e/v6e).
    if (B // BT) * _cdiv(S, TS) == 1:
        if S >= 256:
            TS = _round_up(_cdiv(S, 2), 128)
        elif BT >= 2:
            BT = BT // 2
            while B % BT:
                BT -= 1
    return BT, TS


# ------------------------------ Wrapper --------------------------------------

def conv1x1(x, weight, bias, *, out_dtype=None, target_block_bytes=2 << 20):
    """PyTorch `linear` module: nn.Conv2d(c_in, c_out, kernel_size=(1,1), bias=True).

    x:      (B, C_in, H, W)      NCHW, as in PyTorch
    weight: (C_out, C_in, 1, 1)  or (C_out, C_in)
    bias:   (C_out,)
    out_dtype: optional narrower output dtype (e.g. jnp.bfloat16) to halve the
               dominant output writeback traffic; default keeps x.dtype.
    returns (B, C_out, H, W)
    """
    B, C_in, H, W = x.shape
    C_out = weight.shape[0]
    out_dtype = x.dtype if out_dtype is None else out_dtype

    # Prepare operands once, outside the traced grid body.
    w2 = weight.reshape(C_out, C_in).astype(x.dtype)
    b2 = bias.reshape(C_out, 1).astype(jnp.float32)

    S = H * W
    x3 = x.reshape(B, C_in, S)   # contiguous reshape, no data movement

    in_it = jnp.dtype(x.dtype).itemsize
    out_it = jnp.dtype(out_dtype).itemsize
    BT, TS = _pick_tiles(B, S, C_in, C_out, in_it, out_it, target_block_bytes)
    grid = (B // BT, _cdiv(S, TS))

    # Double-buffered per-step footprint -> explicit scoped-VMEM limit so the
    # tile budget is honoured on v5e (16 MiB default) and v7x (64 MiB VMEM).
    blk_bytes = 2 * (BT * C_in * TS * in_it + BT * C_out * TS * out_it
                     + C_out * C_in * in_it + C_out * 4)
    vmem_limit = int(min(64 << 20, max(blk_bytes + (4 << 20), 16 << 20)))

    out = pl.pallas_call(
        _conv1x1_kernel,
        out_shape=jax.ShapeDtypeStruct((B, C_out, S), out_dtype),
        grid=grid,
        in_specs=[
            pl.BlockSpec((BT, C_in, TS), lambda b, s: (b, 0, s)),
            pl.BlockSpec((C_out, C_in), lambda b, s: (0, 0)),
            pl.BlockSpec((C_out, 1), lambda b, s: (0, 0)),
        ],
        out_specs=pl.BlockSpec((BT, C_out, TS), lambda b, s: (b, 0, s)),
        compiler_params=pltpu.CompilerParams(
            dimension_semantics=("parallel", "parallel"),
            vmem_limit_bytes=vmem_limit),
    )(x3, w2, b2)

    # NOTE: for very large channel counts (C_in/C_out >= 256) a third
    # "arbitrary" reduction grid axis over C_in with an f32 VMEM accumulator
    # would be needed; not required for this module's small channel sizes.
    return out.reshape(B, C_out, H, W)


# ------------------------------- Demo / test ----------------------------------

if __name__ == "__main__":
    key = jax.random.PRNGKey(0)
    B, C_in, H, W = 2, 4, 16, 16
    C_out = 32

    kx, kw, kb = jax.random.split(key, 3)
    x = jax.random.normal(kx, (B, C_in, H, W), jnp.float32)
    weight = 0.1 * jax.random.normal(kw, (C_out, C_in, 1, 1), jnp.float32)
    bias = 0.1 * jax.random.normal(kb, (C_out,), jnp.float32)

    fwd = jax.jit(conv1x1)
    out = fwd(x, weight, bias)
    jax.block_until_ready(out)
    assert out.shape == (B, C_out, H, W)
    assert out.dtype == x.dtype

    # Plain-JAX reference of the 1x1 conv (channel contraction + bias).
    ref = (jnp.einsum("oi,bihw->bohw", weight.reshape(C_out, C_in), x,
                      precision="highest")
           + bias.reshape(1, C_out, 1, 1))
    max_err = float(jnp.max(jnp.abs(out - ref)))
    assert max_err < 1e-2, f"max abs err {max_err}"

    print("KERNEL_OK")
</pallas_src>

<mosaic_0001>
module attributes {stable_mosaic.version = 11 : i64} {
  func.func @_conv1x1_kernel(%arg0: i32, %arg1: i32, %arg2: memref<2x4x128xf32, #tpu.memory_space<vmem>>, %arg3: memref<32x4xf32, #tpu.memory_space<vmem>>, %arg4: memref<32x1xf32, #tpu.memory_space<vmem>>, %arg5: memref<2x32x128xf32, #tpu.memory_space<vmem>>) attributes {dimension_semantics = [#tpu.dimension_semantics<parallel>, #tpu.dimension_semantics<parallel>], iteration_bounds = array<i64: 1, 2>, scalar_prefetch = 0 : i64, scratch_operands = 0 : i64, tpu.core_type = #tpu.core_type<tc>, window_params = [{transform_indices = @transform_0, window_bounds = array<i64: 2, 4, 128>}, {pipeline_mode = #tpu.pipeline_mode<synchronous>, transform_indices = @transform_1, window_bounds = array<i64: 32, 4>}, {pipeline_mode = #tpu.pipeline_mode<synchronous>, transform_indices = @transform_2, window_bounds = array<i64: 32, 1>}, {transform_indices = @transform_3, window_bounds = array<i64: 2, 32, 128>}]} {
    %c0 = arith.constant 0 : index
    %c0_0 = arith.constant 0 : index
    %0 = vector.load %arg3[%c0, %c0_0] : memref<32x4xf32, #tpu.memory_space<vmem>>, vector<32x4xf32>
    %c0_1 = arith.constant 0 : index
    %c0_2 = arith.constant 0 : index
    %1 = vector.load %arg4[%c0_1, %c0_2] : memref<32x1xf32, #tpu.memory_space<vmem>>, vector<32x1xf32>
    %c0_3 = arith.constant 0 : index
    %c0_4 = arith.constant 0 : index
    %c0_5 = arith.constant 0 : index
    %2 = vector.load %arg2[%c0_3, %c0_4, %c0_5] : memref<2x4x128xf32, #tpu.memory_space<vmem>>, vector<1x4x128xf32>
    %3 = vector.shape_cast %2 : vector<1x4x128xf32> to vector<4x128xf32>
    %cst = arith.constant dense<0.000000e+00> : vector<32x128xf32>
    %4 = tpu.matmul %0, %3, %cst {dimension_numbers = #tpu.dot_dimension_numbers<[1], [0], [0], [1], [0, 0, 1, 1], [], []>} : vector<32x4xf32>, vector<4x128xf32>, vector<32x128xf32> -> vector<32x128xf32>
    %5 = vector.broadcast %1 : vector<32x1xf32> to vector<32x128xf32>
    %6 = arith.addf %4, %5 : vector<32x128xf32>
    %c0_6 = arith.constant 0 : index
    %c0_7 = arith.constant 0 : index
    %c0_8 = arith.constant 0 : index
    %7 = vector.load %arg5[%c0_6, %c0_7, %c0_8] : memref<2x32x128xf32, #tpu.memory_space<vmem>>, vector<1x32x128xf32>
    %8 = vector.shape_cast %7 : vector<1x32x128xf32> to vector<32x128xf32>
    %9 = vector.shape_cast %6 : vector<32x128xf32> to vector<1x32x128xf32>
    tpu.vector_store %arg5[%c0_6, %c0_7, %c0_8], %9 {strides = array<i32>} : memref<2x32x128xf32, #tpu.memory_space<vmem>>, vector<1x32x128xf32>,
    %c1 = arith.constant 1 : index
    %c0_9 = arith.constant 0 : index
    %c0_10 = arith.constant 0 : index
    %10 = vector.load %arg2[%c1, %c0_9, %c0_10] : memref<2x4x128xf32, #tpu.memory_space<vmem>>, vector<1x4x128xf32>
    %11 = vector.shape_cast %10 : vector<1x4x128xf32> to vector<4x128xf32>
    %cst_11 = arith.constant dense<0.000000e+00> : vector<32x128xf32>
    %12 = tpu.matmul %0, %11, %cst_11 {dimension_numbers = #tpu.dot_dimension_numbers<[1], [0], [0], [1], [0, 0, 1, 1], [], []>} : vector<32x4xf32>, vector<4x128xf32>, vector<32x128xf32> -> vector<32x128xf32>
    %13 = vector.broadcast %1 : vector<32x1xf32> to vector<32x128xf32>
    %14 = arith.addf %12, %13 : vector<32x128xf32>
    %c1_12 = arith.constant 1 : index
    %c0_13 = arith.constant 0 : index
    %c0_14 = arith.constant 0 : index
    %15 = vector.load %arg5[%c1_12, %c0_13, %c0_14] : memref<2x32x128xf32, #tpu.memory_space<vmem>>, vector<1x32x128xf32>
    %16 = vector.shape_cast %15 : vector<1x32x128xf32> to vector<32x128xf32>
    %17 = vector.shape_cast %14 : vector<32x128xf32> to vector<1x32x128xf32>
    tpu.vector_store %arg5[%c1_12, %c0_13, %c0_14], %17 {strides = array<i32>} : memref<2x32x128xf32, #tpu.memory_space<vmem>>, vector<1x32x128xf32>,
    return
  }
  func.func @transform_0(%arg0: i32, %arg1: i32) -> (i32, i32, i32) {
    %c0_i32 = arith.constant 0 : i32
    %c0_i32_0 = arith.constant 0 : i32
    return %arg0, %c0_i32, %arg1 : i32, i32, i32
  }
  func.func @transform_1(%arg0: i32, %arg1: i32) -> (i32, i32) {
    %c0_i32 = arith.constant 0 : i32
    %c0_i32_0 = arith.constant 0 : i32
    %c0_i32_1 = arith.constant 0 : i32
    return %c0_i32, %c0_i32_0 : i32, i32
  }
  func.func @transform_2(%arg0: i32, %arg1: i32) -> (i32, i32) {
    %c0_i32 = arith.constant 0 : i32
    %c0_i32_0 = arith.constant 0 : i32
    %c0_i32_1 = arith.constant 0 : i32
    return %c0_i32, %c0_i32_0 : i32, i32
  }
  func.func @transform_3(%arg0: i32, %arg1: i32) -> (i32, i32, i32) {
    %c0_i32 = arith.constant 0 : i32
    %c0_i32_0 = arith.constant 0 : i32
    return %arg0, %c0_i32, %arg1 : i32, i32, i32
  }
}

</mosaic_0001>

<llo_original>
// kernel: conv1x1.1
$region0: #{conv1x1.1}
  #allocation0 [shape = 'u32[]', space=smem, size = 0x4, offset = 0x4, fixed_abs, tag = 'smem constant byte address 0x4 - core index']
  #allocation1 [shape = 'u32[72,128]{1,0:T(1,128)}', space=vmem, size = 0x9000, scoped, tag = 'internal scratch']
  %s0 = inlined_call_operand.vmem [shape: f32[2,4,256], index: 0, kind: input, shape index: {}]
  %s1 = inlined_call_operand.vmem [shape: f32[32,4], index: 1, kind: input, shape index: {}]
  %s2 = inlined_call_operand.vmem [shape: f32[32,1], index: 2, kind: input, shape index: {}]
  %s3 = inlined_call_operand.vmem [shape: f32[2,32,256], index: 3, kind: output, shape index: {}]
  %s4 = sld [smem:[#allocation0]]
  $region120: #{conv1x1.1} parent=0
    _
  %s6 = ssub.s32 1, %s4
  %s7 = scalar_select 0, %s6, %s4
  $region1: #{conv1x1.1} parent=0
    #allocation2 [shape = 'u8[8192]{0}', space=vmem, size = 0x2000, scoped, tag = 'input window, operand 0']
    #allocation3 [shape = 'u8[65536]{0}', space=vmem, size = 0x10000, scoped, tag = 'output window, operand 0']
    loop: start=0, step=1, limit=4
    $region2: #{conv1x1.1} parent=1 // loop_pre_header
      _
    $region3: #{conv1x1.1} parent=1 // loop_header
      %s9 = sphi 0, %s13
      %p10 = scmp.ge.s32.totalorder %s9, 4
      %s16 = sphi 0, %s28
      %s17 = sphi 0, %s24
      %s18 = sphi 0, %s16
      %s19 = sphi 0, %s17
      %s20 = sphi 0, %s18
      %s21 = sphi 0, %s19
      %s33 = sphi 0, %s35
      %s36 = sphi 0, %s33
      %s37 = sphi 0, %s36
      %s53 = sphi 0, %s37
      %s57 = sphi 0, %s57
      %s59 = sphi 0, %s57
      %s60 = sphi 0, %s59
      %s74 = sphi 0, %s60
      %s78 = sphi 0, %s78
      %s80 = sphi 0, %s78
      %s81 = sphi 0, %s80
      %s95 = sphi 0, %s81
      %s103 = sphi 0, %s105
      %s106 = sphi 0, %s103
      %s107 = sphi 0, %s106
      %s123 = sphi 0, %s107
    $region4: #{conv1x1.1} parent=1 // loop_header_branch
      %12 = sbr.rel (%p10) target = $region8
    $region5: #{conv1x1.1} parent=1 // loop_body
      %s14 = ssub.s32 %s9, 1
      %s15 = ssub.s32 %s9, 2
      %s22 = sadd.s32 1, %s17
      %p23 = scmp.ge.s32.totalorder %s22, 2
      %s24 = scalar_select %p23, 0, %s22
      %s25 = sadd.s32 1, %s16
      %s26 = scalar_select %p23, %s25, %s16
      %p27 = scmp.ge.s32.totalorder %s26, 1
      %s28 = scalar_select %p27, 0, %s26
      %s29 = ssub.s32 %s16, %s28
      %s30 = ssub.s32 %s17, %s24
      %s31 = sor.u32 %s29, %s30
      %p32 = scmp.eq.s32.totalorder %s31, 0
      %s34 = sadd.s32 %s33, 1
      %s35 = scalar_select %p32, %s33, %s34
      %p38 = pneg %p32
      %p39 = scmp.eq.s32.totalorder %s9, 1
      %p40 = por %p38, %p39
      %p41 = scmp.ne.s32.totalorder %s33, %s36
      %p42 = scmp.eq.s32.totalorder %s9, 0
      %p43 = por %p41, %p42
      %p44 = scmp.ne.s32.totalorder %s33, %s36
      %p45 = scmp.eq.s32.totalorder %s14, 1
      %p46 = por %p44, %p45
      %p47 = scmp.ne.s32.totalorder %s36, %s37
      %p48 = scmp.eq.s32.totalorder %s14, 0
      %p49 = por %p47, %p48
      %p50 = scmp.ne.s32.totalorder %s36, %s37
      %p51 = scmp.eq.s32.totalorder %s15, 1
      %p52 = por %p50, %p51
      %p54 = scmp.ne.s32.totalorder %s37, %s53
      %p55 = scmp.eq.s32.totalorder %s15, 0
      %p56 = por %p54, %p55
      %s58 = sadd.s32 %s57, 1
      %p61 = scmp.eq.s32.totalorder %s9, 1
      %p62 = scmp.ne.s32.totalorder %s57, %s59
      %p63 = scmp.eq.s32.totalorder %s9, 0
      %p64 = por %p62, %p63
      %p65 = scmp.ne.s32.totalorder %s57, %s59
      %p66 = scmp.eq.s32.totalorder %s14, 1
      %p67 = por %p65, %p66
      %p68 = scmp.ne.s32.totalorder %s59, %s60
      %p69 = scmp.eq.s32.totalorder %s14, 0
      %p70 = por %p68, %p69
      %p71 = scmp.ne.s32.totalorder %s59, %s60
      %p72 = scmp.eq.s32.totalorder %s15, 1
      %p73 = por %p71, %p72
      %p75 = scmp.ne.s32.totalorder %s60, %s74
      %p76 = scmp.eq.s32.totalorder %s15, 0
      %p77 = por %p75, %p76
      %s79 = sadd.s32 %s78, 1
      %p82 = scmp.eq.s32.totalorder %s9, 1
      %p83 = scmp.ne.s32.totalorder %s78, %s80
      %p84 = scmp.eq.s32.totalorder %s9, 0
      %p85 = por %p83, %p84
      %p86 = scmp.ne.s32.totalorder %s78, %s80
      %p87 = scmp.eq.s32.totalorder %s14, 1
      %p88 = por %p86, %p87
      %p89 = scmp.ne.s32.totalorder %s80, %s81
      %p90 = scmp.eq.s32.totalorder %s14, 0
      %p91 = por %p89, %p90
      %p92 = scmp.ne.s32.totalorder %s80, %s81
      %p93 = scmp.eq.s32.totalorder %s15, 1
      %p94 = por %p92, %p93
      %p96 = scmp.ne.s32.totalorder %s81, %s95
      %p97 = scmp.eq.s32.totalorder %s15, 0
      %p98 = por %p96, %p97
      %s99 = ssub.s32 %s16, %s28
      %s100 = ssub.s32 %s17, %s24
      %s101 = sor.u32 %s99, %s100
      %p102 = scmp.eq.s32.totalorder %s101, 0
      %s104 = sadd.s32 %s103, 1
      %s105 = scalar_select %p102, %s103, %s104
      %p108 = pneg %p102
      %p109 = scmp.eq.s32.totalorder %s9, 1
      %p110 = por %p108, %p109
      %p111 = scmp.ne.s32.totalorder %s103, %s106
      %p112 = scmp.eq.s32.totalorder %s9, 0
      %p113 = por %p111, %p112
      %p114 = scmp.ne.s32.totalorder %s103, %s106
      %p115 = scmp.eq.s32.totalorder %s14, 1
      %p116 = por %p114, %p115
      %p117 = scmp.ne.s32.totalorder %s106, %s107
      %p118 = scmp.eq.s32.totalorder %s14, 0
      %p119 = por %p117, %p118
      %p120 = scmp.ne.s32.totalorder %s106, %s107
      %p121 = scmp.eq.s32.totalorder %s15, 1
      %p122 = por %p120, %p121
      %p124 = scmp.ne.s32.totalorder %s107, %s123
      %p125 = scmp.eq.s32.totalorder %s15, 0
      %p126 = por %p124, %p125
      %p127 = scmp.le.s32.totalorder 1, %s9
      %p128 = scmp.lt.s32.totalorder %s9, 3
      %p129 = pnand %p127, %p128
      %p130 = pneg %p129
      // Predicated region
      $region9: #{conv1x1.1} parent=5 // pred_check
        _
      $region10: #{conv1x1.1} parent=5 // pred_check_branch
        %132 = sbr.rel (%p129) target = $region12
      $region11: #{conv1x1.1} parent=5 // pred_region
        %s133 = ssub.s32 %s9, 1
        // Predicated region
        $region13: #{conv1x1.1} parent=11 // pred_check
          %p134 = pneg %p70
        $region14: #{conv1x1.1} parent=11 // pred_check_branch
          %136 = sbr.rel (%p134) target = $region16
        $region15: #{conv1x1.1} parent=11 // pred_region
          _
        $region16: #{conv1x1.1} parent=11 // pred_fallthru
          _
        // Predicated region
        $region17: #{conv1x1.1} parent=11 // pred_check
          %p137 = pneg %p91
        $region18: #{conv1x1.1} parent=11 // pred_check_branch
          %139 = sbr.rel (%p137) target = $region20
        $region19: #{conv1x1.1} parent=11 // pred_region
          _
        $region20: #{conv1x1.1} parent=11 // pred_fallthru
          _
      $region12: #{conv1x1.1} parent=5 // pred_fallthru
        _
      %p140 = scmp.lt.s32.totalorder %s9, 2
      // Predicated region
      $region21: #{conv1x1.1} parent=5 // pred_check
        %p141 = pneg %p140
      $region22: #{conv1x1.1} parent=5 // pred_check_branch
        %143 = sbr.rel (%p141) target = $region24
      $region23: #{conv1x1.1} parent=5 // pred_region
        // Predicated region
        $region25: #{conv1x1.1} parent=23 // pred_check
          %p144 = pneg %p43
        $region26: #{conv1x1.1} parent=23 // pred_check_branch
          %146 = sbr.rel (%p144) target = $region28
        $region27: #{conv1x1.1} parent=23 // pred_region
          %s147 = sand.u32 %s33, 1
          %s148 = sand.u32 %s33, 1
          %s149 = smul.addr %s148, 8
          %s150 = scalar_lea.vmem [#allocation2], %s149
          %s151 = smul.u32 2, %s16
          %s152 = smul.addr %s151, 2
          %s153 = sadd.s32 %s17, %s152
          %s154 = smul.addr %s153, 4
          %s155 = scalar_lea.vmem %s0, %s154
          // Predicated region
          $region29: #{conv1x1.1} parent=27 // pred_check
            _
          $region30: #{conv1x1.1} parent=27 // pred_check_branch
            %157 = sbr.rel (0) target = $region32
          $region31: #{conv1x1.1} parent=27 // pred_region
            // Predicated region
            $region33: #{conv1x1.1} parent=31 // pred_check
              _
            $region34: #{conv1x1.1} parent=31 // pred_check_branch
              %159 = sbr.rel target = $region36
            $region35: #{conv1x1.1} parent=31 // pred_region
              // Predicated region
              $region48: #{conv1x1.1} parent=35 // pred_check
                _
              $region49: #{conv1x1.1} parent=35 // pred_check_branch
                %177 = sbr.rel (0) target = $region51
              $region50: #{conv1x1.1} parent=35 // pred_region
                loop: start=0, step=1, limit=1
                $region52: #{conv1x1.1} parent=50 // loop_pre_header
                  _
                $region53: #{conv1x1.1} parent=50 // loop_header
                  %s179 = sphi 0, %s183
                  %p180 = scmp.ge.s32.totalorder %s179, 1
                  %s184 = sphi %s155, %s155
                  %s185 = sphi %s150, %s150
                $region54: #{conv1x1.1} parent=50 // loop_header_branch
                  %182 = sbr.rel (%p180) target = $region58
                $region55: #{conv1x1.1} parent=50 // loop_body
                  _
                $region56: #{conv1x1.1} parent=50 // loop_footer
                  %s183 = sadd.s32 1, %s179
                $region57: #{conv1x1.1} parent=50 // loop_footer_branch
                  %178 = sbr.rel target = $region53
                $region58: #{conv1x1.1} parent=50 // loop_exit
                  _
                %s187 = ssub.s32 16, 1
                loop: start=0, step=1, limit=1
                $region59: #{conv1x1.1} parent=50 // loop_pre_header
                  _
                $region60: #{conv1x1.1} parent=50 // loop_header
                  %s189 = sphi 0, %s193
                  %p190 = scmp.ge.s32.totalorder %s189, 1
                  %s194 = sphi %s155, %s155
                  %s195 = sphi %s150, %s150
                $region61: #{conv1x1.1} parent=50 // loop_header_branch
                  %192 = sbr.rel (%p190) target = $region65
                $region62: #{conv1x1.1} parent=50 // loop_body
                  %v196 = vld [vmem:[%s194] sm:%s187]
                  %197 = vst [vmem:[%s195] sm:%s187] %v196
                  %v198 = vld [vmem:[%s194 + $0x8] sm:%s187]
                  %199 = vst [vmem:[%s195 + $0x4] sm:%s187] %v198
                $region63: #{conv1x1.1} parent=50 // loop_footer
                  %s193 = sadd.s32 1, %s189
                $region64: #{conv1x1.1} parent=50 // loop_footer_branch
                  %188 = sbr.rel target = $region60
                $region65: #{conv1x1.1} parent=50 // loop_exit
                  _
              $region51: #{conv1x1.1} parent=35 // pred_fallthru
                _
            $region36: #{conv1x1.1} parent=31 // pred_fallthru
              _
            // Predicated region
            $region37: #{conv1x1.1} parent=31 // pred_check
              _
            $region38: #{conv1x1.1} parent=31 // pred_check_branch
              %161 = sbr.rel (0) target = $region40
            $region39: #{conv1x1.1} parent=31 // pred_region
              %s163 = ssub.s32 16, 1
              loop: start=0, step=1, limit=1
              $region41: #{conv1x1.1} parent=39 // loop_pre_header
                _
              $region42: #{conv1x1.1} parent=39 // loop_header
                %s165 = sphi 0, %s169
                %p166 = scmp.ge.s32.totalorder %s165, 1
                %s170 = sphi %s155, %s155
                %s171 = sphi %s150, %s150
              $region43: #{conv1x1.1} parent=39 // loop_header_branch
                %168 = sbr.rel (%p166) target = $region47
              $region44: #{conv1x1.1} parent=39 // loop_body
                %v172 = vld [vmem:[%s170] sm:%s163]
                %173 = vst [vmem:[%s171] sm:%s163] %v172
                %v174 = vld [vmem:[%s170 + $0x8] sm:%s163]
                %175 = vst [vmem:[%s171 + $0x4] sm:%s163] %v174
              $region45: #{conv1x1.1} parent=39 // loop_footer
                %s169 = sadd.s32 1, %s165
              $region46: #{conv1x1.1} parent=39 // loop_footer_branch
                %164 = sbr.rel target = $region42
              $region47: #{conv1x1.1} parent=39 // loop_exit
                _
            $region40: #{conv1x1.1} parent=31 // pred_fallthru
              _
          $region32: #{conv1x1.1} parent=27 // pred_fallthru
            _
          %200 = vnop
        $region28: #{conv1x1.1} parent=23 // pred_fallthru
          _
      $region24: #{conv1x1.1} parent=5 // pred_fallthru
        _
      %p201 = scmp.le.s32.totalorder 1, %s9
      %p202 = scmp.lt.s32.totalorder %s9, 3
      %p203 = pnand %p201, %p202
      %p204 = pneg %p203
      // Predicated region
      $region66: #{conv1x1.1} parent=5 // pred_check
        _
      $region67: #{conv1x1.1} parent=5 // pred_check_branch
        %206 = sbr.rel (%p203) target = $region69
      $region68: #{conv1x1.1} parent=5 // pred_region
        %s207 = ssub.s32 %s9, 1
        %s208 = sand.u32 %s36, 1
        %s209 = sand.u32 %s36, 1
        %s210 = smul.addr %s209, 8
        %s211 = scalar_lea.vmem [#allocation2], %s210
        // Predicated region
        $region70: #{conv1x1.1} parent=68 // pred_check
          %p212 = pneg %p49
        $region71: #{conv1x1.1} parent=68 // pred_check_branch
          %214 = sbr.rel (%p212) target = $region73
        $region72: #{conv1x1.1} parent=68 // pred_region
          _
        $region73: #{conv1x1.1} parent=68 // pred_fallthru
          _
        %s215 = sand.u32 %s36, 1
        %s216 = sand.u32 %s36, 1
        %s217 = smul.addr %s216, 8
        %s218 = scalar_lea.vmem [#allocation2], %s217
        %p219 = pneg %p49
        %p220 = pneg %p46
        %p221 = pneg %p70
        %p222 = pneg %p67
        %p223 = pneg %p91
        %p224 = pneg %p88
        %p225 = pneg %p119
        %p226 = pneg %p116
        %s227 = sand.u32 %s106, 1
        %s228 = sand.u32 %s106, 1
        %s229 = smul.addr %s228, 64
        %s230 = scalar_lea.vmem [#allocation3], %s229
        %s231 = smul.u32 2, %s18
        %s232 = smul.u32 2, %s18
        %v233 = vld [vmem:[%s1] sm:$0xff]
        %v234 = vld [vmem:[%s1 + $0x8] sm:$0xff]
        %v235 = vld [vmem:[%s1 + $0x10] sm:$0xff]
        %v236 = vld [vmem:[%s1 + $0x18] sm:$0xff]
        %v237 = vld [vmem:[%s2] sm:$0xff]
        %v238 = vld [vmem:[%s2 + $0x8] sm:$0xff]
        %v239 = vld [vmem:[%s2 + $0x10] sm:$0xff]
        %v240 = vld [vmem:[%s2 + $0x18] sm:$0xff]
        %v241 = vld [vmem:[%s211] sm:$0xf]
        %243 = vset.pattern.permute.xlu0 0
        %244 = vperm.xlu0 %243, %v237
        %v245 = vpop.permute.xlu0 %244
        %248 = vset.pattern.permute.xlu0 0
        %249 = vperm.xlu0 %248, %v238
        %v250 = vpop.permute.xlu0 %249
        %253 = vset.pattern.permute.xlu0 0
        %254 = vperm.xlu0 %253, %v239
        %v255 = vpop.permute.xlu0 %254
        %258 = vset.pattern.permute.xlu0 0
        %259 = vperm.xlu0 %258, %v240
        %v260 = vpop.permute.xlu0 %259
        %vm262 = vcmask 31744
        %v264 = vsel %vm262, %v233, 0
        %v267 = vsel %vm262, %v234, 0
        %v270 = vsel %vm262, %v235, 0
        %v273 = vsel %vm262, %v236, 0
        %vm275 = vcmask 1043456
        %v277 = vsel %vm275, %v241, 0
        %279 = vmatpush.msra.mxu0 0.0
        %280 = vmatpush.msra.mxu0 0.0
        %281 = vmatpush.msra.mxu0 0.0
        %282 = vmatpush.msra.mxu0 0.0
        %283 = vmatpush.msra.mxu0 0.0
        %284 = vmatpush.msra.mxu0 0.0
        %285 = vmatpush.msra.mxu0 0.0
        %286 = vmatpush.msra.mxu0 0.0
        %287 = vmatpush.msra.mxu0 0.0
        %288 = vmatpush.msra.mxu0 0.0
        %289 = vmatpush.msra.mxu0 0.0
        %290 = vmatpush.msra.mxu0 0.0
        %291 = vmatpush.msra.mxu0 0.0
        %292 = vmatpush.msra.mxu0 0.0
        %293 = vmatpush.msra.mxu0 0.0
        %294 = vmatpush.msra.mxu0 %v277
        %295 = vmatmul.f32.gmra.mxu0 %v264
        %v296 = vpop.f32.mrf.mxu0
        %v297 = vadd.f32 %v245, %v296
        %298 = vmatmul.f32.gmra.mxu0 %v267
        %v299 = vpop.f32.mrf.mxu0
        %v300 = vadd.f32 %v250, %v299
        %301 = vmatmul.f32.gmra.mxu0 %v270
        %v302 = vpop.f32.mrf.mxu0
        %v303 = vadd.f32 %v255, %v302
        %304 = vmatmul.f32.gmra.mxu0 %v273
        %v305 = vpop.f32.mrf.mxu0
        %v306 = vadd.f32 %v260, %v305
        %307 = vdwg.mxu0
        %308 = vst [vmem:[%s230] sm:$0xff] %v297
        %309 = vst [vmem:[%s230 + $0x8] sm:$0xff] %v300
        %310 = vst [vmem:[%s230 + $0x10] sm:$0xff] %v303
        %311 = vst [vmem:[%s230 + $0x18] sm:$0xff] %v306
        %s312 = scalar_lea.vmem %s211, 4 [#allocation2]
        %v313 = vld [vmem:[%s312] sm:$0xf]
        %v315 = vsel %vm275, %v313, 0
        %317 = vmatpush.msra.mxu0 0.0
        %318 = vmatpush.msra.mxu0 0.0
        %319 = vmatpush.msra.mxu0 0.0
        %320 = vmatpush.msra.mxu0 0.0
        %321 = vmatpush.msra.mxu0 0.0
        %322 = vmatpush.msra.mxu0 0.0
        %323 = vmatpush.msra.mxu0 0.0
        %324 = vmatpush.msra.mxu0 0.0
        %325 = vmatpush.msra.mxu0 0.0
        %326 = vmatpush.msra.mxu0 0.0
        %327 = vmatpush.msra.mxu0 0.0
        %328 = vmatpush.msra.mxu0 0.0
        %329 = vmatpush.msra.mxu0 0.0
        %330 = vmatpush.msra.mxu0 0.0
        %331 = vmatpush.msra.mxu0 0.0
        %332 = vmatpush.msra.mxu0 %v315
        %333 = vmatmul.f32.gmra.mxu0 %v264
        %v334 = vpop.f32.mrf.mxu0
        %v335 = vadd.f32 %v245, %v334
        %336 = vmatmul.f32.gmra.mxu0 %v267
        %v337 = vpop.f32.mrf.mxu0
        %v338 = vadd.f32 %v250, %v337
        %339 = vmatmul.f32.gmra.mxu0 %v270
        %v340 = vpop.f32.mrf.mxu0
        %v341 = vadd.f32 %v255, %v340
        %342 = vmatmul.f32.gmra.mxu0 %v273
        %v343 = vpop.f32.mrf.mxu0
        %v344 = vadd.f32 %v260, %v343
        %345 = vdwg.mxu0
        %s346 = scalar_lea.vmem %s230, 32 [#allocation3]
        %347 = vst [vmem:[%s346] sm:$0xff] %v335
        %348 = vst [vmem:[%s346 + $0x8] sm:$0xff] %v338
        %349 = vst [vmem:[%s346 + $0x10] sm:$0xff] %v341
        %350 = vst [vmem:[%s346 + $0x18] sm:$0xff] %v344
        %s351 = sand.u32 %s106, 1
        %s352 = sand.u32 %s106, 1
        %s353 = smul.addr %s352, 64
        %s354 = scalar_lea.vmem [#allocation3], %s353
        // Predicated region
        $region74: #{conv1x1.1} parent=68 // pred_check
          %p355 = pneg %p116
        $region75: #{conv1x1.1} parent=68 // pred_check_branch
          %357 = sbr.rel (%p355) target = $region77
        $region76: #{conv1x1.1} parent=68 // pred_region
          %s358 = smul.u32 2, %s18
          %s359 = smul.addr %s358, 8
          %s360 = sadd.s32 %s19, %s359
          %s361 = smul.addr %s360, 8
          %s362 = scalar_lea.vmem %s3, %s361
          // Predicated region
          $region78: #{conv1x1.1} parent=76 // pred_check
            _
          $region79: #{conv1x1.1} parent=76 // pred_check_branch
            %364 = sbr.rel (0) target = $region81
          $region80: #{conv1x1.1} parent=76 // pred_region
            // Predicated region
            $region82: #{conv1x1.1} parent=80 // pred_check
              _
            $region83: #{conv1x1.1} parent=80 // pred_check_branch
              %366 = sbr.rel (0) target = $region85
            $region84: #{conv1x1.1} parent=80 // pred_region
              // Predicated region
              $region97: #{conv1x1.1} parent=84 // pred_check
                _
              $region98: #{conv1x1.1} parent=84 // pred_check_branch
                %396 = sbr.rel (0) target = $region100
              $region99: #{conv1x1.1} parent=84 // pred_region
                loop: start=0, step=1, limit=1
                $region101: #{conv1x1.1} parent=99 // loop_pre_header
                  _
                $region102: #{conv1x1.1} parent=99 // loop_header
                  %s398 = sphi 0, %s402
                  %p399 = scmp.ge.s32.totalorder %s398, 1
                  %s403 = sphi %s354, %s354
                  %s404 = sphi %s362, %s362
                $region103: #{conv1x1.1} parent=99 // loop_header_branch
                  %401 = sbr.rel (%p399) target = $region107
                $region104: #{conv1x1.1} parent=99 // loop_body
                  %v405 = vld [vmem:[%s403] sm:$0xff]
                  %406 = vst [vmem:[%s404] sm:$0xff] %v405
                  %v407 = vld [vmem:[%s403 + $0x8] sm:$0xff]
                  %408 = vst [vmem:[%s404 + $0x10] sm:$0xff] %v407
                  %v409 = vld [vmem:[%s403 + $0x10] sm:$0xff]
                  %410 = vst [vmem:[%s404 + $0x20] sm:$0xff] %v409
                  %v411 = vld [vmem:[%s403 + $0x18] sm:$0xff]
                  %412 = vst [vmem:[%s404 + $0x30] sm:$0xff] %v411
                  %v413 = vld [vmem:[%s403 + $0x20] sm:$0xff]
                  %414 = vst [vmem:[%s404 + $0x40] sm:$0xff] %v413
                  %v415 = vld [vmem:[%s403 + $0x28] sm:$0xff]
                  %416 = vst [vmem:[%s404 + $0x50] sm:$0xff] %v415
                  %v417 = vld [vmem:[%s403 + $0x30] sm:$0xff]
                  %418 = vst [vmem:[%s404 + $0x60] sm:$0xff] %v417
                  %v419 = vld [vmem:[%s403 + $0x38] sm:$0xff]
                  %420 = vst [vmem:[%s404 + $0x70] sm:$0xff] %v419
                $region105: #{conv1x1.1} parent=99 // loop_footer
                  %s402 = sadd.s32 1, %s398
                $region106: #{conv1x1.1} parent=99 // loop_footer_branch
                  %397 = sbr.rel target = $region102
                $region107: #{conv1x1.1} parent=99 // loop_exit
                  _
              $region100: #{conv1x1.1} parent=84 // pred_fallthru
                _
              // Predicated region
              $region108: #{conv1x1.1} parent=84 // pred_check
                _
              $region109: #{conv1x1.1} parent=84 // pred_check_branch
                %422 = sbr.rel target = $region111
              $region110: #{conv1x1.1} parent=84 // pred_region
                _
              $region111: #{conv1x1.1} parent=84 // pred_fallthru
                _
            $region85: #{conv1x1.1} parent=80 // pred_fallthru
              _
            // Predicated region
            $region86: #{conv1x1.1} parent=80 // pred_check
              _
            $region87: #{conv1x1.1} parent=80 // pred_check_branch
              %368 = sbr.rel target = $region89
            $region88: #{conv1x1.1} parent=80 // pred_region
              %s370 = ssub.s32 256, 1
              loop: start=0, step=1, limit=1
              $region90: #{conv1x1.1} parent=88 // loop_pre_header
                _
              $region91: #{conv1x1.1} parent=88 // loop_header
                %s372 = sphi 0, %s376
                %p373 = scmp.ge.s32.totalorder %s372, 1
                %s377 = sphi %s354, %s354
                %s378 = sphi %s362, %s362
              $region92: #{conv1x1.1} parent=88 // loop_header_branch
                %375 = sbr.rel (%p373) target = $region96
              $region93: #{conv1x1.1} parent=88 // loop_body
                %v379 = vld [vmem:[%s377] sm:%s370]
                %380 = vst [vmem:[%s378] sm:%s370] %v379
                %v381 = vld [vmem:[%s377 + $0x8] sm:%s370]
                %382 = vst [vmem:[%s378 + $0x10] sm:%s370] %v381
                %v383 = vld [vmem:[%s377 + $0x10] sm:%s370]
                %384 = vst [vmem:[%s378 + $0x20] sm:%s370] %v383
                %v385 = vld [vmem:[%s377 + $0x18] sm:%s370]
                %386 = vst [vmem:[%s378 + $0x30] sm:%s370] %v385
                %v387 = vld [vmem:[%s377 + $0x20] sm:%s370]
                %388 = vst [vmem:[%s378 + $0x40] sm:%s370] %v387
                %v389 = vld [vmem:[%s377 + $0x28] sm:%s370]
                %390 = vst [vmem:[%s378 + $0x50] sm:%s370] %v389
                %v391 = vld [vmem:[%s377 + $0x30] sm:%s370]
                %392 = vst [vmem:[%s378 + $0x60] sm:%s370] %v391
                %v393 = vld [vmem:[%s377 + $0x38] sm:%s370]
                %394 = vst [vmem:[%s378 + $0x70] sm:%s370] %v393
              $region94: #{conv1x1.1} parent=88 // loop_footer
                %s376 = sadd.s32 1, %s372
              $region95: #{conv1x1.1} parent=88 // loop_footer_branch
                %371 = sbr.rel target = $region91
              $region96: #{conv1x1.1} parent=88 // loop_exit
                _
            $region89: #{conv1x1.1} parent=80 // pred_fallthru
              _
          $region81: #{conv1x1.1} parent=76 // pred_fallthru
            _
          %423 = vnop
        $region77: #{conv1x1.1} parent=68 // pred_fallthru
          _
      $region69: #{conv1x1.1} parent=5 // pred_fallthru
        _
      %p424 = scmp.le.s32.totalorder 2, %s9
      // Predicated region
      $region112: #{conv1x1.1} parent=5 // pred_check
        %p425 = pneg %p424
      $region113: #{conv1x1.1} parent=5 // pred_check_branch
        %427 = sbr.rel (%p425) target = $region115
      $region114: #{conv1x1.1} parent=5 // pred_region
        %s428 = ssub.s32 %s9, 2
        // Predicated region
        $region116: #{conv1x1.1} parent=114 // pred_check
          %p429 = pneg %p122
        $region117: #{conv1x1.1} parent=114 // pred_check_branch
          %431 = sbr.rel (%p429) target = $region119
        $region118: #{conv1x1.1} parent=114 // pred_region
          %s432 = sand.u32 %s107, 1
          %s433 = sand.u32 %s107, 1
          %s434 = smul.addr %s433, 64
          %s435 = scalar_lea.vmem [#allocation3], %s434
        $region119: #{conv1x1.1} parent=114 // pred_fallthru
          _
      $region115: #{conv1x1.1} parent=5 // pred_fallthru
        _
    $region6: #{conv1x1.1} parent=1 // loop_footer
      %s13 = sadd.s32 1, %s9
    $region7: #{conv1x1.1} parent=1 // loop_footer_branch
      %8 = sbr.rel target = $region3
    $region8: #{conv1x1.1} parent=1 // loop_exit
      _

</llo_original>
